<compile_context>
chip_gen: v6e
topology: v6e:2x2x1
jax: 0.10.0
libtpu: 0.0.40
codegen_flags: <defaults>
</compile_context>

<pallas_src>
import functools

import jax
import jax.numpy as jnp
from jax.experimental import pallas as pl
from jax.experimental.pallas import tpu as pltpu


def _round_up(x, m):
    return ((x + m - 1) // m) * m


def _combined_query_kernel(pc_ref, mask_ref, w_pc_ref, w_mask_ref, b_ref, o_ref,
                           *, compute_dtype):
    # pc_ref:     (tm, pc_dim)     VMEM
    # mask_ref:   (tm, mask_dim)   VMEM
    # w_pc_ref:   (pc_dim, tn)     VMEM
    # w_mask_ref: (mask_dim, tn)   VMEM
    # b_ref:      (1, tn)          VMEM (f32)
    # o_ref:      (tm, tn)         VMEM
    pc = pc_ref[...]
    mask = mask_ref[...]
    if compute_dtype is not None:
        # Cast AFTER the load (free under the MXU) instead of in the wrapper,
        # which would cost an extra full HBM pass over the activations.
        pc = pc.astype(compute_dtype)
        mask = mask.astype(compute_dtype)
    acc = jnp.dot(pc, w_pc_ref[...], preferred_element_type=jnp.float32)
    acc = acc + jnp.dot(mask, w_mask_ref[...], preferred_element_type=jnp.float32)
    o_ref[...] = (acc + b_ref[...].astype(jnp.float32)).astype(o_ref.dtype)


def _block_vmem_bytes(tm, tn, pc_dim, mask_dim, act_bytes, w_bytes, out_bytes):
    per_step = (tm * (pc_dim + mask_dim)) * act_bytes \
               + (pc_dim + mask_dim) * tn * w_bytes \
               + tn * 4 \
               + tm * tn * out_bytes
    return 2 * per_step  # double-buffered pipeline


def _tn_candidates(dm_pad):
    # Prefer a single j tile (weights DMA'd exactly once for the whole grid),
    # otherwise fall back to 128-multiple divisors of dm_pad (<= 1024).
    cands = []
    if dm_pad <= 4096:
        cands.append(dm_pad)
    d = dm_pad // 128
    for k in range(d, 0, -1):
        t = 128 * k
        if d % k == 0 and t <= 1024 and t not in cands:
            cands.append(t)
    return cands


@functools.partial(jax.jit, static_argnames=("tm", "compute_dtype", "out_dtype"))
def combined_query_builder(pc_emb, mask_emb, w, b, *, tm=1024,
                           compute_dtype=None, out_dtype=None):
    """
    pc_emb:   (B, N, pc_dim)
    mask_emb: (B, N, mask_dim)
    w:        (pc_dim + mask_dim, d_model)   (transposed vs torch's weight)
    b:        (d_model,)
    Returns:  (B, N, d_model) in out_dtype (default: pc_emb's dtype).
    """
    B, N, pc_dim = pc_emb.shape
    mask_dim = mask_emb.shape[-1]
    d_model = w.shape[-1]
    if out_dtype is None:
        out_dtype = pc_emb.dtype

    M = B * N
    K = pc_dim + mask_dim

    pc2 = pc_emb.reshape(M, pc_dim)
    mask2 = mask_emb.reshape(M, mask_dim)

    # ---- d_model padding: multiple of 128 only (lane-dense stores) ----------
    dm_pad = _round_up(d_model, 128)
    w_pc = w[:pc_dim, :]
    w_mask = w[pc_dim:, :]
    b2 = b.reshape(1, d_model).astype(jnp.float32)
    if dm_pad > d_model:
        w_pc = jnp.pad(w_pc, ((0, 0), (0, dm_pad - d_model)))
        w_mask = jnp.pad(w_mask, ((0, 0), (0, dm_pad - d_model)))
        b2 = jnp.pad(b2, ((0, 0), (0, dm_pad - d_model)))
    if compute_dtype is not None:
        # Weights cast once in the wrapper (tiny); activations cast in-kernel.
        w_pc = w_pc.astype(compute_dtype)
        w_mask = w_mask.astype(compute_dtype)

    act_bytes = jnp.dtype(pc_emb.dtype).itemsize
    w_bytes = jnp.dtype(w_pc.dtype).itemsize
    out_bytes = jnp.dtype(out_dtype).itemsize

    # ---- VMEM budget (v7x has only 64 MiB/TC; v5e/v6e have 128 MiB) ---------
    try:
        vmem_cap = int(pltpu.get_tpu_info().vmem_capacity_bytes)
    except Exception:
        vmem_cap = 64 * 1024 * 1024  # safe lower bound (v7x per-TC)
    budget = int(vmem_cap * 0.7)     # headroom for compiler scratch / spills

    # ---- tile selection ------------------------------------------------------
    tm_max = min(tm, max(16, _round_up(M, 16)))   # 16: native bf16 sublane tile
    tm_cands = []
    t = tm_max
    while t >= 256:
        tm_cands.append(t)
        t //= 2
    if not tm_cands:
        tm_cands = [tm_max]

    tm_eff, tn = tm_cands[-1], 128
    found = False
    for tn_try in _tn_candidates(dm_pad):
        for tm_try in tm_cands:
            if _block_vmem_bytes(tm_try, tn_try, pc_dim, mask_dim,
                                 act_bytes, w_bytes, out_bytes) <= budget:
                tm_eff, tn = tm_try, tn_try
                found = True
                break
        if found:
            break

    grid_m = pl.cdiv(M, tm_eff)
    grid_n = dm_pad // tn
    # v7x shards the "parallel" axes across its 2 TensorCores: make sure there
    # are at least 2 grid steps when the row count allows it.
    if grid_m * grid_n < 2 and M > 16:
        tm_eff = max(16, _round_up(pl.cdiv(M, 2), 16))
        grid_m = pl.cdiv(M, tm_eff)

    vmem_need = _block_vmem_bytes(tm_eff, tn, pc_dim, mask_dim,
                                  act_bytes, w_bytes, out_bytes) + (8 << 20)
    vmem_limit = int(min(max(vmem_need, 32 << 20), int(vmem_cap * 0.9)))

    cost = pl.CostEstimate(
        flops=2 * M * K * dm_pad,
        transcendentals=0,
        bytes_accessed=(M * K * act_bytes
                        + K * dm_pad * w_bytes
                        + dm_pad * 4
                        + M * dm_pad * out_bytes),
    )

    kernel = functools.partial(_combined_query_kernel, compute_dtype=compute_dtype)

    out2 = pl.pallas_call(
        kernel,
        out_shape=jax.ShapeDtypeStruct((M, dm_pad), out_dtype),
        grid_spec=pltpu.PrefetchScalarGridSpec(
            num_scalar_prefetch=0,
            grid=(grid_m, grid_n),
            in_specs=[
                pl.BlockSpec((tm_eff, pc_dim), lambda i, j: (i, 0)),
                pl.BlockSpec((tm_eff, mask_dim), lambda i, j: (i, 0)),
                pl.BlockSpec((pc_dim, tn), lambda i, j: (0, j)),
                pl.BlockSpec((mask_dim, tn), lambda i, j: (0, j)),
                pl.BlockSpec((1, tn), lambda i, j: (0, j)),
            ],
            out_specs=pl.BlockSpec((tm_eff, tn), lambda i, j: (i, j)),
        ),
        compiler_params=pltpu.CompilerParams(
            dimension_semantics=("parallel", "parallel"),
            vmem_limit_bytes=vmem_limit,
        ),
        cost_estimate=cost,
    )(pc2, mask2, w_pc, w_mask, b2)

    if dm_pad > d_model:
        out2 = out2[:, :d_model]
    return out2.reshape(B, N, d_model)


if __name__ == "__main__":
    # Small shapes consistent with the module's forward (module defaults: 256).
    B, N = 2, 8
    pc_dim, mask_dim, d_model = 256, 256, 256

    key = jax.random.PRNGKey(0)
    k_pc, k_mask, k_w, k_b = jax.random.split(key, 4)

    pc_emb = jax.random.normal(k_pc, (B, N, pc_dim), dtype=jnp.float32)
    mask_emb = jax.random.normal(k_mask, (B, N, mask_dim), dtype=jnp.float32)

    # Deterministic parameter init (nn.Linear-style uniform bound).
    fan_in = pc_dim + mask_dim
    bound = 1.0 / (fan_in ** 0.5)
    # w stored as (in_features, out_features) = transpose of torch's weight.
    w = jax.random.uniform(k_w, (fan_in, d_model), minval=-bound, maxval=bound,
                           dtype=jnp.float32)
    b = jax.random.uniform(k_b, (d_model,), minval=-bound, maxval=bound,
                           dtype=jnp.float32)

    out = combined_query_builder(pc_emb, mask_emb, w, b)
    out = jax.block_until_ready(out)

    # Pure-JAX reference: cat + linear, exactly the PyTorch semantics.
    ref = jnp.concatenate([pc_emb, mask_emb], axis=-1) @ w + b
    assert out.shape == (B, N, d_model)
    assert jnp.allclose(out, ref, atol=2e-3, rtol=2e-3), \
        float(jnp.max(jnp.abs(out - ref)))

    # bf16 fast path (weights streamed as bf16, activations cast in-kernel).
    out_bf16 = combined_query_builder(pc_emb, mask_emb, w, b,
                                      compute_dtype=jnp.bfloat16)
    out_bf16 = jax.block_until_ready(out_bf16)
    assert out_bf16.shape == (B, N, d_model)
    assert jnp.allclose(out_bf16, ref, atol=5e-2, rtol=5e-2)

    print("KERNEL_OK")
</pallas_src>

<mosaic_0001>
module attributes {stable_mosaic.version = 11 : i64} {
  func.func @_combined_query_kernel(%arg0: i32, %arg1: i32, %arg2: memref<16x256xf32, #tpu.memory_space<vmem>>, %arg3: memref<16x256xf32, #tpu.memory_space<vmem>>, %arg4: memref<256x256xf32, #tpu.memory_space<vmem>>, %arg5: memref<256x256xf32, #tpu.memory_space<vmem>>, %arg6: memref<1x256xf32, #tpu.memory_space<vmem>>, %arg7: memref<16x256xf32, #tpu.memory_space<vmem>>) attributes {dimension_semantics = [#tpu.dimension_semantics<parallel>, #tpu.dimension_semantics<parallel>], iteration_bounds = array<i64: 1, 1>, scalar_prefetch = 0 : i64, scratch_operands = 0 : i64, tpu.core_type = #tpu.core_type<tc>, window_params = [{transform_indices = @transform_0, window_bounds = array<i64: 16, 256>}, {transform_indices = @transform_1, window_bounds = array<i64: 16, 256>}, {transform_indices = @transform_2, window_bounds = array<i64: 256, 256>}, {transform_indices = @transform_3, window_bounds = array<i64: 256, 256>}, {transform_indices = @transform_4, window_bounds = array<i64: 1, 256>}, {transform_indices = @transform_5, window_bounds = array<i64: 16, 256>}]} {
    %c0 = arith.constant 0 : index
    %c0_0 = arith.constant 0 : index
    %0 = vector.load %arg2[%c0, %c0_0] : memref<16x256xf32, #tpu.memory_space<vmem>>, vector<16x256xf32>
    %c0_1 = arith.constant 0 : index
    %c0_2 = arith.constant 0 : index
    %1 = vector.load %arg3[%c0_1, %c0_2] : memref<16x256xf32, #tpu.memory_space<vmem>>, vector<16x256xf32>
    %c0_3 = arith.constant 0 : index
    %c0_4 = arith.constant 0 : index
    %2 = vector.load %arg4[%c0_3, %c0_4] : memref<256x256xf32, #tpu.memory_space<vmem>>, vector<256x256xf32>
    %cst = arith.constant dense<0.000000e+00> : vector<16x256xf32>
    %3 = tpu.matmul %0, %2, %cst {dimension_numbers = #tpu.dot_dimension_numbers<[1], [0], [0], [1], [0, 0, 1, 1], [], []>} : vector<16x256xf32>, vector<256x256xf32>, vector<16x256xf32> -> vector<16x256xf32>
    %c0_5 = arith.constant 0 : index
    %c0_6 = arith.constant 0 : index
    %4 = vector.load %arg5[%c0_5, %c0_6] : memref<256x256xf32, #tpu.memory_space<vmem>>, vector<256x256xf32>
    %cst_7 = arith.constant dense<0.000000e+00> : vector<16x256xf32>
    %5 = tpu.matmul %1, %4, %cst_7 {dimension_numbers = #tpu.dot_dimension_numbers<[1], [0], [0], [1], [0, 0, 1, 1], [], []>} : vector<16x256xf32>, vector<256x256xf32>, vector<16x256xf32> -> vector<16x256xf32>
    %6 = arith.addf %3, %5 : vector<16x256xf32>
    %c0_8 = arith.constant 0 : index
    %c0_9 = arith.constant 0 : index
    %7 = vector.load %arg6[%c0_8, %c0_9] : memref<1x256xf32, #tpu.memory_space<vmem>>, vector<1x256xf32>
    %8 = vector.broadcast %7 : vector<1x256xf32> to vector<16x256xf32>
    %9 = arith.addf %6, %8 : vector<16x256xf32>
    %c0_10 = arith.constant 0 : index
    %c0_11 = arith.constant 0 : index
    %10 = vector.load %arg7[%c0_10, %c0_11] : memref<16x256xf32, #tpu.memory_space<vmem>>, vector<16x256xf32>
    tpu.vector_store %arg7[%c0_10, %c0_11], %9 {strides = array<i32>} : memref<16x256xf32, #tpu.memory_space<vmem>>, vector<16x256xf32>,
    return
  }
  func.func @transform_0(%arg0: i32, %arg1: i32) -> (i32, i32) {
    %c0_i32 = arith.constant 0 : i32
    %c0_i32_0 = arith.constant 0 : i32
    return %arg0, %c0_i32 : i32, i32
  }
  func.func @transform_1(%arg0: i32, %arg1: i32) -> (i32, i32) {
    %c0_i32 = arith.constant 0 : i32
    %c0_i32_0 = arith.constant 0 : i32
    return %arg0, %c0_i32 : i32, i32
  }
  func.func @transform_2(%arg0: i32, %arg1: i32) -> (i32, i32) {
    %c0_i32 = arith.constant 0 : i32
    %c0_i32_0 = arith.constant 0 : i32
    return %c0_i32, %arg1 : i32, i32
  }
  func.func @transform_3(%arg0: i32, %arg1: i32) -> (i32, i32) {
    %c0_i32 = arith.constant 0 : i32
    %c0_i32_0 = arith.constant 0 : i32
    return %c0_i32, %arg1 : i32, i32
  }
  func.func @transform_4(%arg0: i32, %arg1: i32) -> (i32, i32) {
    %c0_i32 = arith.constant 0 : i32
    %c0_i32_0 = arith.constant 0 : i32
    return %c0_i32, %arg1 : i32, i32
  }
  func.func @transform_5(%arg0: i32, %arg1: i32) -> (i32, i32) {
    %c0_i32 = arith.constant 0 : i32
    return %arg0, %arg1 : i32, i32
  }
}

</mosaic_0001>

<llo_original>
// kernel: combined_query_builder.1
$region0: #{combined_query_builder.1}
  #allocation0 [shape = 'u32[]', space=smem, size = 0x4, offset = 0x4, fixed_abs, tag = 'smem constant byte address 0x4 - core index']
  #allocation1 [shape = 'u32[144,128]{1,0:T(1,128)}', space=vmem, size = 0x12000, scoped, tag = 'internal scratch']
  %s0 = inlined_call_operand.vmem [shape: f32[16,256], index: 0, kind: input, shape index: {}]
  %s1 = inlined_call_operand.vmem [shape: f32[16,256], index: 1, kind: input, shape index: {}]
  %s2 = inlined_call_operand.vmem [shape: f32[256,256], index: 2, kind: input, shape index: {}]
  %s3 = inlined_call_operand.vmem [shape: f32[256,256], index: 3, kind: input, shape index: {}]
  %s4 = inlined_call_operand.vmem [shape: f32[1,256], index: 4, kind: input, shape index: {}]
  %s5 = inlined_call_operand.hbm [shape: f32[16,256], index: 5, kind: output, shape index: {}]
  %s6 = sld [smem:[#allocation0]]
  $region30: #{combined_query_builder.1} parent=0
    _
  %s8 = ssub.s32 1, %s6
  %s9 = scalar_select 0, %s8, %s6
  $region1: #{combined_query_builder.1} parent=0
    #allocation2 [shape = 'u8[16384]{0}', space=vmem, size = 0x4000, scoped, tag = 'output window, operand 0, single buffered']
    #allocation3 [shape = 's32[1]{0}', space=sflag, size = 0x4, scoped, tag = 'scoped memory for combined_query_builder.1']
    %10 = vsyncpa [#allocation3], 0
    // Predicated region
    $region2: #{combined_query_builder.1} parent=1 // pred_check
      _
    $region3: #{combined_query_builder.1} parent=1 // pred_check_branch
      %12 = sbr.rel (0) target = $region5
    $region4: #{combined_query_builder.1} parent=1 // pred_region
      _
    $region5: #{combined_query_builder.1} parent=1 // pred_fallthru
      _
    // Predicated region
    $region6: #{combined_query_builder.1} parent=1 // pred_check
      _
    $region7: #{combined_query_builder.1} parent=1 // pred_check_branch
      %14 = sbr.rel (0) target = $region9
    $region8: #{combined_query_builder.1} parent=1 // pred_region
      _
    $region9: #{combined_query_builder.1} parent=1 // pred_fallthru
      _
    // Predicated region
    $region10: #{combined_query_builder.1} parent=1 // pred_check
      _
    $region11: #{combined_query_builder.1} parent=1 // pred_check_branch
      %16 = sbr.rel (0) target = $region13
    $region12: #{combined_query_builder.1} parent=1 // pred_region
      _
    $region13: #{combined_query_builder.1} parent=1 // pred_fallthru
      _
    // Predicated region
    $region14: #{combined_query_builder.1} parent=1 // pred_check
      _
    $region15: #{combined_query_builder.1} parent=1 // pred_check_branch
      %18 = sbr.rel (0) target = $region17
    $region16: #{combined_query_builder.1} parent=1 // pred_region
      _
    $region17: #{combined_query_builder.1} parent=1 // pred_fallthru
      _
    // Predicated region
    $region18: #{combined_query_builder.1} parent=1 // pred_check
      _
    $region19: #{combined_query_builder.1} parent=1 // pred_check_branch
      %20 = sbr.rel (0) target = $region21
    $region20: #{combined_query_builder.1} parent=1 // pred_region
      _
    $region21: #{combined_query_builder.1} parent=1 // pred_fallthru
      _
    %v21 = vld [vmem:[%s0] sm:$0xff]
    %v22 = vld [vmem:[%s0 + $0x8] sm:$0xff]
    %v23 = vld [vmem:[%s0 + $0x10] sm:$0xff]
    %v24 = vld [vmem:[%s0 + $0x18] sm:$0xff]
    %v25 = vld [vmem:[%s1] sm:$0xff]
    %v26 = vld [vmem:[%s1 + $0x8] sm:$0xff]
    %v27 = vld [vmem:[%s1 + $0x10] sm:$0xff]
    %v28 = vld [vmem:[%s1 + $0x18] sm:$0xff]
    %v29 = vld [vmem:[%s2] sm:$0xff]
    %v30 = vld [vmem:[%s2 + $0x8] sm:$0xff]
    %v31 = vld [vmem:[%s2 + $0x10] sm:$0xff]
    %v32 = vld [vmem:[%s2 + $0x18] sm:$0xff]
    %v33 = vld [vmem:[%s2 + $0x20] sm:$0xff]
    %v34 = vld [vmem:[%s2 + $0x28] sm:$0xff]
    %v35 = vld [vmem:[%s2 + $0x30] sm:$0xff]
    %v36 = vld [vmem:[%s2 + $0x38] sm:$0xff]
    %v37 = vld [vmem:[%s2 + $0x40] sm:$0xff]
    %v38 = vld [vmem:[%s2 + $0x48] sm:$0xff]
    %v39 = vld [vmem:[%s2 + $0x50] sm:$0xff]
    %v40 = vld [vmem:[%s2 + $0x58] sm:$0xff]
    %v41 = vld [vmem:[%s2 + $0x60] sm:$0xff]
    %v42 = vld [vmem:[%s2 + $0x68] sm:$0xff]
    %v43 = vld [vmem:[%s2 + $0x70] sm:$0xff]
    %v44 = vld [vmem:[%s2 + $0x78] sm:$0xff]
    %v45 = vld [vmem:[%s2 + $0x80] sm:$0xff]
    %v46 = vld [vmem:[%s2 + $0x88] sm:$0xff]
    %v47 = vld [vmem:[%s2 + $0x90] sm:$0xff]
    %v48 = vld [vmem:[%s2 + $0x98] sm:$0xff]
    %v49 = vld [vmem:[%s2 + $0xa0] sm:$0xff]
    %v50 = vld [vmem:[%s2 + $0xa8] sm:$0xff]
    %v51 = vld [vmem:[%s2 + $0xb0] sm:$0xff]
    %v52 = vld [vmem:[%s2 + $0xb8] sm:$0xff]
    %v53 = vld [vmem:[%s2 + $0xc0] sm:$0xff]
    %v54 = vld [vmem:[%s2 + $0xc8] sm:$0xff]
    %v55 = vld [vmem:[%s2 + $0xd0] sm:$0xff]
    %v56 = vld [vmem:[%s2 + $0xd8] sm:$0xff]
    %v57 = vld [vmem:[%s2 + $0xe0] sm:$0xff]
    %v58 = vld [vmem:[%s2 + $0xe8] sm:$0xff]
    %v59 = vld [vmem:[%s2 + $0xf0] sm:$0xff]
    %v60 = vld [vmem:[%s2 + $0xf8] sm:$0xff]
    %v61 = vld [vmem:[%s2 + $0x100] sm:$0xff]
    %v62 = vld [vmem:[%s2 + $0x108] sm:$0xff]
    %v63 = vld [vmem:[%s2 + $0x110] sm:$0xff]
    %v64 = vld [vmem:[%s2 + $0x118] sm:$0xff]
    %v65 = vld [vmem:[%s2 + $0x120] sm:$0xff]
    %v66 = vld [vmem:[%s2 + $0x128] sm:$0xff]
    %v67 = vld [vmem:[%s2 + $0x130] sm:$0xff]
    %v68 = vld [vmem:[%s2 + $0x138] sm:$0xff]
    %v69 = vld [vmem:[%s2 + $0x140] sm:$0xff]
    %v70 = vld [vmem:[%s2 + $0x148] sm:$0xff]
    %v71 = vld [vmem:[%s2 + $0x150] sm:$0xff]
    %v72 = vld [vmem:[%s2 + $0x158] sm:$0xff]
    %v73 = vld [vmem:[%s2 + $0x160] sm:$0xff]
    %v74 = vld [vmem:[%s2 + $0x168] sm:$0xff]
    %v75 = vld [vmem:[%s2 + $0x170] sm:$0xff]
    %v76 = vld [vmem:[%s2 + $0x178] sm:$0xff]
    %v77 = vld [vmem:[%s2 + $0x180] sm:$0xff]
    %v78 = vld [vmem:[%s2 + $0x188] sm:$0xff]
    %v79 = vld [vmem:[%s2 + $0x190] sm:$0xff]
    %v80 = vld [vmem:[%s2 + $0x198] sm:$0xff]
    %v81 = vld [vmem:[%s2 + $0x1a0] sm:$0xff]
    %v82 = vld [vmem:[%s2 + $0x1a8] sm:$0xff]
    %v83 = vld [vmem:[%s2 + $0x1b0] sm:$0xff]
    %v84 = vld [vmem:[%s2 + $0x1b8] sm:$0xff]
    %v85 = vld [vmem:[%s2 + $0x1c0] sm:$0xff]
    %v86 = vld [vmem:[%s2 + $0x1c8] sm:$0xff]
    %v87 = vld [vmem:[%s2 + $0x1d0] sm:$0xff]
    %v88 = vld [vmem:[%s2 + $0x1d8] sm:$0xff]
    %v89 = vld [vmem:[%s2 + $0x1e0] sm:$0xff]
    %v90 = vld [vmem:[%s2 + $0x1e8] sm:$0xff]
    %v91 = vld [vmem:[%s2 + $0x1f0] sm:$0xff]
    %v92 = vld [vmem:[%s2 + $0x1f8] sm:$0xff]
    %v93 = vld [vmem:[%s3] sm:$0xff]
    %v94 = vld [vmem:[%s3 + $0x8] sm:$0xff]
    %v95 = vld [vmem:[%s3 + $0x10] sm:$0xff]
    %v96 = vld [vmem:[%s3 + $0x18] sm:$0xff]
    %v97 = vld [vmem:[%s3 + $0x20] sm:$0xff]
    %v98 = vld [vmem:[%s3 + $0x28] sm:$0xff]
    %v99 = vld [vmem:[%s3 + $0x30] sm:$0xff]
    %v100 = vld [vmem:[%s3 + $0x38] sm:$0xff]
    %v101 = vld [vmem:[%s3 + $0x40] sm:$0xff]
    %v102 = vld [vmem:[%s3 + $0x48] sm:$0xff]
    %v103 = vld [vmem:[%s3 + $0x50] sm:$0xff]
    %v104 = vld [vmem:[%s3 + $0x58] sm:$0xff]
    %v105 = vld [vmem:[%s3 + $0x60] sm:$0xff]
    %v106 = vld [vmem:[%s3 + $0x68] sm:$0xff]
    %v107 = vld [vmem:[%s3 + $0x70] sm:$0xff]
    %v108 = vld [vmem:[%s3 + $0x78] sm:$0xff]
    %v109 = vld [vmem:[%s3 + $0x80] sm:$0xff]
    %v110 = vld [vmem:[%s3 + $0x88] sm:$0xff]
    %v111 = vld [vmem:[%s3 + $0x90] sm:$0xff]
    %v112 = vld [vmem:[%s3 + $0x98] sm:$0xff]
    %v113 = vld [vmem:[%s3 + $0xa0] sm:$0xff]
    %v114 = vld [vmem:[%s3 + $0xa8] sm:$0xff]
    %v115 = vld [vmem:[%s3 + $0xb0] sm:$0xff]
    %v116 = vld [vmem:[%s3 + $0xb8] sm:$0xff]
    %v117 = vld [vmem:[%s3 + $0xc0] sm:$0xff]
    %v118 = vld [vmem:[%s3 + $0xc8] sm:$0xff]
    %v119 = vld [vmem:[%s3 + $0xd0] sm:$0xff]
    %v120 = vld [vmem:[%s3 + $0xd8] sm:$0xff]
    %v121 = vld [vmem:[%s3 + $0xe0] sm:$0xff]
    %v122 = vld [vmem:[%s3 + $0xe8] sm:$0xff]
    %v123 = vld [vmem:[%s3 + $0xf0] sm:$0xff]
    %v124 = vld [vmem:[%s3 + $0xf8] sm:$0xff]
    %v125 = vld [vmem:[%s3 + $0x100] sm:$0xff]
    %v126 = vld [vmem:[%s3 + $0x108] sm:$0xff]
    %v127 = vld [vmem:[%s3 + $0x110] sm:$0xff]
    %v128 = vld [vmem:[%s3 + $0x118] sm:$0xff]
    %v129 = vld [vmem:[%s3 + $0x120] sm:$0xff]
    %v130 = vld [vmem:[%s3 + $0x128] sm:$0xff]
    %v131 = vld [vmem:[%s3 + $0x130] sm:$0xff]
    %v132 = vld [vmem:[%s3 + $0x138] sm:$0xff]
    %v133 = vld [vmem:[%s3 + $0x140] sm:$0xff]
    %v134 = vld [vmem:[%s3 + $0x148] sm:$0xff]
    %v135 = vld [vmem:[%s3 + $0x150] sm:$0xff]
    %v136 = vld [vmem:[%s3 + $0x158] sm:$0xff]
    %v137 = vld [vmem:[%s3 + $0x160] sm:$0xff]
    %v138 = vld [vmem:[%s3 + $0x168] sm:$0xff]
    %v139 = vld [vmem:[%s3 + $0x170] sm:$0xff]
    %v140 = vld [vmem:[%s3 + $0x178] sm:$0xff]
    %v141 = vld [vmem:[%s3 + $0x180] sm:$0xff]
    %v142 = vld [vmem:[%s3 + $0x188] sm:$0xff]
    %v143 = vld [vmem:[%s3 + $0x190] sm:$0xff]
    %v144 = vld [vmem:[%s3 + $0x198] sm:$0xff]
    %v145 = vld [vmem:[%s3 + $0x1a0] sm:$0xff]
    %v146 = vld [vmem:[%s3 + $0x1a8] sm:$0xff]
    %v147 = vld [vmem:[%s3 + $0x1b0] sm:$0xff]
    %v148 = vld [vmem:[%s3 + $0x1b8] sm:$0xff]
    %v149 = vld [vmem:[%s3 + $0x1c0] sm:$0xff]
    %v150 = vld [vmem:[%s3 + $0x1c8] sm:$0xff]
    %v151 = vld [vmem:[%s3 + $0x1d0] sm:$0xff]
    %v152 = vld [vmem:[%s3 + $0x1d8] sm:$0xff]
    %v153 = vld [vmem:[%s3 + $0x1e0] sm:$0xff]
    %v154 = vld [vmem:[%s3 + $0x1e8] sm:$0xff]
    %v155 = vld [vmem:[%s3 + $0x1f0] sm:$0xff]
    %v156 = vld [vmem:[%s3 + $0x1f8] sm:$0xff]
    %157 = vmatprep.subr.mxu0 %v124
    %158 = vmatpush1.msra.mxu0 %v123
    %159 = vmatprep.subr.mxu0 %v122
    %160 = vmatpush1.msra.mxu0 %v121
    %161 = vmatprep.subr.mxu0 %v120
    %162 = vmatpush1.msra.mxu0 %v119
    %163 = vmatprep.subr.mxu0 %v118
    %164 = vmatpush1.msra.mxu0 %v117
    %165 = vmatprep.subr.mxu0 %v116
    %166 = vmatpush1.msra.mxu0 %v115
    %167 = vmatprep.subr.mxu0 %v114
    %168 = vmatpush1.msra.mxu0 %v113
    %169 = vmatprep.subr.mxu0 %v112
    %170 = vmatpush1.msra.mxu0 %v111
    %171 = vmatprep.subr.mxu0 %v110
    %172 = vmatpush1.msra.mxu0 %v109
    %173 = vmatprep.subr.mxu0 %v108
    %174 = vmatpush1.msra.mxu0 %v107
    %175 = vmatprep.subr.mxu0 %v106
    %176 = vmatpush1.msra.mxu0 %v105
    %177 = vmatprep.subr.mxu0 %v104
    %178 = vmatpush1.msra.mxu0 %v103
    %179 = vmatprep.subr.mxu0 %v102
    %180 = vmatpush1.msra.mxu0 %v101
    %181 = vmatprep.subr.mxu0 %v100
    %182 = vmatpush1.msra.mxu0 %v99
    %183 = vmatprep.subr.mxu0 %v98
    %184 = vmatpush1.msra.mxu0 %v97
    %185 = vmatprep.subr.mxu0 %v96
    %186 = vmatpush1.msra.mxu0 %v95
    %187 = vmatprep.subr.mxu0 %v94
    %188 = vmatpush1.msra.mxu0 %v93
    %189 = vmatprep.subr.mxu0 %v156
    %190 = vmatpush2.msra.mxu0 %v155
    %191 = vmatprep.subr.mxu0 %v154
    %192 = vmatpush2.msra.mxu0 %v153
    %193 = vmatprep.subr.mxu0 %v152
    %194 = vmatpush2.msra.mxu0 %v151
    %195 = vmatprep.subr.mxu0 %v150
    %196 = vmatpush2.msra.mxu0 %v149
    %197 = vmatprep.subr.mxu0 %v148
    %198 = vmatpush2.msra.mxu0 %v147
    %199 = vmatprep.subr.mxu0 %v146
    %200 = vmatpush2.msra.mxu0 %v145
    %201 = vmatprep.subr.mxu0 %v144
    %202 = vmatpush2.msra.mxu0 %v143
    %203 = vmatprep.subr.mxu0 %v142
    %204 = vmatpush2.msra.mxu0 %v141
    %205 = vmatprep.subr.mxu0 %v140
    %206 = vmatpush2.msra.mxu0 %v139
    %207 = vmatprep.subr.mxu0 %v138
    %208 = vmatpush2.msra.mxu0 %v137
    %209 = vmatprep.subr.mxu0 %v136
    %210 = vmatpush2.msra.mxu0 %v135
    %211 = vmatprep.subr.mxu0 %v134
    %212 = vmatpush2.msra.mxu0 %v133
    %213 = vmatprep.subr.mxu0 %v132
    %214 = vmatpush2.msra.mxu0 %v131
    %215 = vmatprep.subr.mxu0 %v130
    %216 = vmatpush2.msra.mxu0 %v129
    %217 = vmatprep.subr.mxu0 %v128
    %218 = vmatpush2.msra.mxu0 %v127
    %219 = vmatprep.subr.mxu0 %v126
    %220 = vmatpush2.msra.mxu0 %v125
    %221 = vmatprep.mubr.f32.mxu0 %v26
    %222 = vmatmul.mubr.f32.gmra.mxu0 %v25
    %v223 = vpop.f32.mrf.mxu0
    %v224 = vadd.f32 0.0, %v223
    %v225 = vpop.f32.mrf.mxu0
    %v226 = vadd.f32 0.0, %v225
    %227 = vmatprep.mubr.f32.mxu0 %v28
    %228 = vmatmul.mubr.f32.gmra.mxu0 %v27
    %v229 = vpop.f32.mrf.mxu0
    %v230 = vadd.f32 0.0, %v229
    %v231 = vpop.f32.mrf.mxu0
    %v232 = vadd.f32 0.0, %v231
    %233 = vdwg.mxu0
    %234 = vmatprep.subr.mxu0 %v60
    %235 = vmatpush1.msra.mxu0 %v59
    %236 = vmatprep.subr.mxu0 %v58
    %237 = vmatpush1.msra.mxu0 %v57
    %238 = vmatprep.subr.mxu0 %v56
    %239 = vmatpush1.msra.mxu0 %v55
    %240 = vmatprep.subr.mxu0 %v54
    %241 = vmatpush1.msra.mxu0 %v53
    %242 = vmatprep.subr.mxu0 %v52
    %243 = vmatpush1.msra.mxu0 %v51
    %244 = vmatprep.subr.mxu0 %v50
    %245 = vmatpush1.msra.mxu0 %v49
    %246 = vmatprep.subr.mxu0 %v48
    %247 = vmatpush1.msra.mxu0 %v47
    %248 = vmatprep.subr.mxu0 %v46
    %249 = vmatpush1.msra.mxu0 %v45
    %250 = vmatprep.subr.mxu0 %v44
    %251 = vmatpush1.msra.mxu0 %v43
    %252 = vmatprep.subr.mxu0 %v42
    %253 = vmatpush1.msra.mxu0 %v41
    %254 = vmatprep.subr.mxu0 %v40
    %255 = vmatpush1.msra.mxu0 %v39
    %256 = vmatprep.subr.mxu0 %v38
    %257 = vmatpush1.msra.mxu0 %v37
    %258 = vmatprep.subr.mxu0 %v36
    %259 = vmatpush1.msra.mxu0 %v35
    %260 = vmatprep.subr.mxu0 %v34
    %261 = vmatpush1.msra.mxu0 %v33
    %262 = vmatprep.subr.mxu0 %v32
    %263 = vmatpush1.msra.mxu0 %v31
    %264 = vmatprep.subr.mxu0 %v30
    %265 = vmatpush1.msra.mxu0 %v29
    %266 = vmatprep.subr.mxu0 %v92
    %267 = vmatpush2.msra.mxu0 %v91
    %268 = vmatprep.subr.mxu0 %v90
    %269 = vmatpush2.msra.mxu0 %v89
    %270 = vmatprep.subr.mxu0 %v88
    %271 = vmatpush2.msra.mxu0 %v87
    %272 = vmatprep.subr.mxu0 %v86
    %273 = vmatpush2.msra.mxu0 %v85
    %274 = vmatprep.subr.mxu0 %v84
    %275 = vmatpush2.msra.mxu0 %v83
    %276 = vmatprep.subr.mxu0 %v82
    %277 = vmatpush2.msra.mxu0 %v81
    %278 = vmatprep.subr.mxu0 %v80
    %279 = vmatpush2.msra.mxu0 %v79
    %280 = vmatprep.subr.mxu0 %v78
    %281 = vmatpush2.msra.mxu0 %v77
    %282 = vmatprep.subr.mxu0 %v76
    %283 = vmatpush2.msra.mxu0 %v75
    %284 = vmatprep.subr.mxu0 %v74
    %285 = vmatpush2.msra.mxu0 %v73
    %286 = vmatprep.subr.mxu0 %v72
    %287 = vmatpush2.msra.mxu0 %v71
    %288 = vmatprep.subr.mxu0 %v70
    %289 = vmatpush2.msra.mxu0 %v69
    %290 = vmatprep.subr.mxu0 %v68
    %291 = vmatpush2.msra.mxu0 %v67
    %292 = vmatprep.subr.mxu0 %v66
    %293 = vmatpush2.msra.mxu0 %v65
    %294 = vmatprep.subr.mxu0 %v64
    %295 = vmatpush2.msra.mxu0 %v63
    %296 = vmatprep.subr.mxu0 %v62
    %297 = vmatpush2.msra.mxu0 %v61
    %298 = vmatprep.mubr.f32.mxu0 %v22
    %299 = vmatmul.mubr.f32.gmra.mxu0 %v21
    %v300 = vpop.f32.mrf.mxu0
    %v301 = vadd.f32 %v224, %v300
    %v302 = vpop.f32.mrf.mxu0
    %v303 = vadd.f32 %v226, %v302
    %304 = vmatprep.mubr.f32.mxu0 %v24
    %305 = vmatmul.mubr.f32.gmra.mxu0 %v23
    %v306 = vpop.f32.mrf.mxu0
    %v307 = vadd.f32 %v230, %v306
    %v308 = vpop.f32.mrf.mxu0
    %v309 = vadd.f32 %v232, %v308
    %310 = vdwg.mxu0
    %v311 = vld [vmem:[%s4] sm:$0x3]
    %v313 = vlaneseq
    %v314 = vshrl.u32 %v313, 7
    %v315 = vsub.s32 0, %v314
    %v316 = vrot.slane %v311, %v315
    %v317 = vlaneseq
    %v318 = vshrl.u32 %v317, 7
    %v319 = vsub.s32 1, %v318
    %v320 = vrot.slane %v311, %v319
    %v323 = vadd.f32 %v301, %v316
    %v324 = vadd.f32 %v303, %v320
    %v325 = vadd.f32 %v307, %v316
    %v326 = vadd.f32 %v309, %v320
    %327 = vst [vmem:[#allocation2] sm:$0xff] %v323
    %328 = vst [vmem:[#allocation2 + $0x8] sm:$0xff] %v324
    %329 = vst [vmem:[#allocation2 + $0x10] sm:$0xff] %v325
    %330 = vst [vmem:[#allocation2 + $0x18] sm:$0xff] %v326
    // Predicated region
    $region22: #{combined_query_builder.1} parent=1 // pred_check
      _
    $region23: #{combined_query_builder.1} parent=1 // pred_check_branch
      %332 = sbr.rel (0) target = $region25
    $region24: #{combined_query_builder.1} parent=1 // pred_region
      %s334 = ssub.s32 512, 512
      %335 = vsyncadd [#allocation3], %s334
      %s336 = sshll.u32 [#allocation2], 4
      %s337 = int_to_ptr.vmem [resolvable:$true] %s336
      %342 = dma.vmem_to_hbm [thread:$0]  %s337, 512, %s5, [#allocation3], 256, 256, 16
    $region25: #{combined_query_builder.1} parent=1 // pred_fallthru
      _
    // Predicated region
    $region26: #{combined_query_builder.1} parent=1 // pred_check
      _
    $region27: #{combined_query_builder.1} parent=1 // pred_check_branch
      %344 = sbr.rel (0) target = $region29
    $region28: #{combined_query_builder.1} parent=1 // pred_region
      %345 = dma.done [#allocation3], 512
    $region29: #{combined_query_builder.1} parent=1 // pred_fallthru
      _
    %346 = vsyncpa [#allocation3], 1

</llo_original>
